<compile_context>
chip_gen: v5e
topology: v5e:2x2
jax: 0.10.0
libtpu: 0.0.40
codegen_flags: <defaults>
</compile_context>

<pallas_src>
import jax
import jax.numpy as jnp
import numpy as np
from jax import lax
from jax.experimental import pallas as pl
from jax.experimental.pallas import tpu as pltpu


def _basicblock_kernel(x_ref, wa_ref, wb_ref, sc_ref, mask_ref, out_ref, mid_ref):
    """One batched slab of B_TILE images per grid step.

    x_ref   : (R, W*Cin)   R = B_TILE*(H+2); H-padded, f32 (residual path).
    wa_ref  : (3, W*Cin, W*Cout)  conv_a banded weights (one matrix per kh tap).
    wb_ref  : (3, W*Cout, W*Cout) conv_b banded weights.
    sc_ref  : (4, W*Cout)  rows = [scale_a, bias_a, scale_b, bias_b] (folded BN).
    mask_ref: (R-2, 1)     1.0 on valid rows, 0.0 on per-image halo rows.
    out_ref : (R, W*Cout)  padded lane-dense output (halo rows written as zero).
    mid_ref : (R, W*Cout)  VMEM scratch for the padded intermediate.
    """
    R = x_ref.shape[0]
    Rv = R - 2                              # rows where all 3 row taps are in-bounds
    cdt = wa_ref.dtype

    # kh=1 operand doubles as the identity residual (rows 1..R-2), kept f32.
    x1 = x_ref[pl.ds(1, Rv), :]
    mask = mask_ref[...]                    # (Rv, 1)

    # ---- conv_a: 3 banded row-tap matmuls over the whole batched slab.
    # (Kept as a += chain: v7x MRB accumulates in place; on v5e/v6e the two
    #  VALU adds are filler under MXU slack at these sizes.)
    acc = jnp.dot(x_ref[pl.ds(0, Rv), :].astype(cdt), wa_ref[0],
                  preferred_element_type=jnp.float32)
    acc += jnp.dot(x1.astype(cdt), wa_ref[1], preferred_element_type=jnp.float32)
    acc += jnp.dot(x_ref[pl.ds(2, Rv), :].astype(cdt), wa_ref[2],
                   preferred_element_type=jnp.float32)
    # fused BN_a + ReLU (f32 epilogue); mask folds the per-image halo zeroing
    # into this single store instead of 2*B_TILE one-row stores.
    y = jnp.maximum(acc * sc_ref[0:1, :] + sc_ref[1:2, :], 0.0) * mask

    wc = mid_ref.shape[1]
    mid_ref[0:1, :] = jnp.zeros((1, wc), mid_ref.dtype)
    mid_ref[R - 1:R, :] = jnp.zeros((1, wc), mid_ref.dtype)
    mid_ref[pl.ds(1, Rv), :] = y.astype(mid_ref.dtype)

    # ---- conv_b: 3 banded row-tap matmuls (operands read as ref slices).
    acc2 = jnp.dot(mid_ref[pl.ds(0, Rv), :], wb_ref[0],
                   preferred_element_type=jnp.float32)
    acc2 += jnp.dot(mid_ref[pl.ds(1, Rv), :], wb_ref[1],
                    preferred_element_type=jnp.float32)
    acc2 += jnp.dot(mid_ref[pl.ds(2, Rv), :], wb_ref[2],
                    preferred_element_type=jnp.float32)
    y2 = acc2 * sc_ref[2:3, :] + sc_ref[3:4, :]

    # identity residual (stride==1, Cin==Cout, same lane layout) + final ReLU.
    # Halo rows forced to zero so the padded output is directly reusable.
    out_ref[0:1, :] = jnp.zeros((1, out_ref.shape[1]), out_ref.dtype)
    out_ref[R - 1:R, :] = jnp.zeros((1, out_ref.shape[1]), out_ref.dtype)
    out_ref[pl.ds(1, Rv), :] = (jnp.maximum(x1 + y2, 0.0) * mask).astype(out_ref.dtype)


def _banded_weight(w_oihw, W, dtype):
    """OIHW (Cout,Cin,3,3) -> (3, W*Cin, W*Cout) banded matrices.

    A[kh][w_in*Cin+ci, w_out*Cout+co] = w[co,ci,kh,kw] where kw = w_in-w_out+1
    (zero outside the 3-wide band) — folds the kw taps AND the width
    zero-padding of a 3x3/pad=1 conv into one matmul per kh row tap.
    """
    Cout, Cin = w_oihw.shape[0], w_oihw.shape[1]
    wt = jnp.transpose(w_oihw.astype(jnp.float32), (2, 3, 1, 0))   # (kh,kw,Ci,Co)
    idx = jnp.arange(W)
    kw = jnp.arange(3)
    band = (idx[None, :, None] - idx[None, None, :]
            == (kw[:, None, None] - 1)).astype(jnp.float32)        # (3, Win, Wout)
    a = jnp.einsum('kab,hkio->haibo', band, wt)    # (3, Win, Cin, Wout, Cout)
    return a.reshape(3, W * Cin, W * Cout).astype(dtype)


def resnet_basicblock(x_nchw, p, *, eps=1e-5, compute_dtype=jnp.bfloat16, b_tile=4):
    """x_nchw: (N, C, H, W) float32. Returns (N, C, H, W) float32.

    compute_dtype: bf16 (default, MXU-native on v5e/v6e/v7x) for weights /
    conv operands / mid scratch; accumulation, BN epilogue and residual stay
    f32.  Pass jnp.float32 for bit-tight comparisons against an f32 reference.
    b_tile: images per grid step; raise it (64-256) for real workloads — VMEM
    per step is ~b_tile*18*128*(4+4+2) bytes plus ~200 KB of weights, far under
    the 32 MiB scoped default even on v7x.
    """
    N, Cin, H, W = x_nchw.shape
    Cout = p["conv_a_w"].shape[0]
    assert Cin == Cout, "identity residual requires inplanes == planes"
    # TODO(synk): stride > 1 / downsample path not implemented.
    Hp = H + 2
    assert (b_tile * Hp) % 8 == 0, "b_tile*(H+2) must be a multiple of 8"
    assert (W * Cin) % 128 == 0, "W*C must be a multiple of 128 (pad channels)"

    # Pad batch to a multiple of b_tile with zero images.
    n_extra = (-N) % b_tile
    if n_extra:
        x_nchw = jnp.concatenate(
            [x_nchw, jnp.zeros((n_extra, Cin, H, W), x_nchw.dtype)], axis=0)
    Np = N + n_extra
    R = b_tile * Hp
    WC = W * Cin
    WCo = W * Cout

    # NCHW -> lane-dense flat slab (Np*(H+2), W*C); W padding lives in weights.
    # TODO(synk): keep this layout across consecutive blocks in real models.
    x = jnp.transpose(x_nchw, (0, 2, 3, 1)).astype(jnp.float32)    # NHWC
    x = jnp.pad(x, ((0, 0), (1, 1), (0, 0), (0, 0)))
    x_slab = x.reshape(Np * Hp, WC)

    wa = _banded_weight(p["conv_a_w"], W, compute_dtype)            # (3, WC, WCo)
    wb = _banded_weight(p["conv_b_w"], W, compute_dtype)            # (3, WCo, WCo)

    # Fold eval-mode BN into per-channel scale/bias, tiled lane-dense over w,
    # packed into a single (4, W*Cout) input.
    sa = p["bn_a_gamma"] / jnp.sqrt(p["bn_a_var"] + eps)
    ba = p["bn_a_beta"] - p["bn_a_mean"] * sa
    sb = p["bn_b_gamma"] / jnp.sqrt(p["bn_b_var"] + eps)
    bb = p["bn_b_beta"] - p["bn_b_mean"] * sb
    scales = jnp.stack([jnp.tile(sa, W), jnp.tile(ba, W),
                        jnp.tile(sb, W), jnp.tile(bb, W)]).astype(jnp.float32)

    # Per-row validity mask for the batched slab (0 on per-image halo rows).
    rows = np.arange(1, R - 1) % Hp
    mask = jnp.asarray(((rows >= 1) & (rows <= H))
                       .astype(np.float32).reshape(R - 2, 1))

    out_slab = pl.pallas_call(
        _basicblock_kernel,
        out_shape=jax.ShapeDtypeStruct((Np * Hp, WCo), jnp.float32),
        grid=(Np // b_tile,),
        in_specs=[
            pl.BlockSpec((R, WC), lambda n: (n, 0)),
            pl.BlockSpec((3, WC, WCo), lambda n: (0, 0, 0)),
            pl.BlockSpec((3, WCo, WCo), lambda n: (0, 0, 0)),
            pl.BlockSpec((4, WCo), lambda n: (0, 0)),
            pl.BlockSpec((R - 2, 1), lambda n: (0, 0)),
        ],
        out_specs=pl.BlockSpec((R, WCo), lambda n: (n, 0)),
        scratch_shapes=[pltpu.VMEM((R, WCo), compute_dtype)],
        compiler_params=pltpu.CompilerParams(dimension_semantics=("parallel",)),
    )(x_slab, wa, wb, scales, mask)

    out = out_slab.reshape(Np, Hp, W, Cout)[:N, 1:H + 1]            # drop halos/pad
    return jnp.transpose(out, (0, 3, 1, 2))                         # back to NCHW


def reference_forward(x_nchw, p, eps=1e-5):
    """Pure-JAX reference (matches PyTorch eval-mode forward)."""
    x = x_nchw.astype(jnp.float32)

    def conv(inp, w):
        return lax.conv_general_dilated(
            inp, w, window_strides=(1, 1), padding=((1, 1), (1, 1)),
            dimension_numbers=("NCHW", "OIHW", "NCHW"))

    def bn(inp, g, b, m, v):
        g = g.reshape(1, -1, 1, 1); b = b.reshape(1, -1, 1, 1)
        m = m.reshape(1, -1, 1, 1); v = v.reshape(1, -1, 1, 1)
        return (inp - m) / jnp.sqrt(v + eps) * g + b

    y = conv(x, p["conv_a_w"])
    y = bn(y, p["bn_a_gamma"], p["bn_a_beta"], p["bn_a_mean"], p["bn_a_var"])
    y = jnp.maximum(y, 0.0)
    y = conv(y, p["conv_b_w"])
    y = bn(y, p["bn_b_gamma"], p["bn_b_beta"], p["bn_b_mean"], p["bn_b_var"])
    return jnp.maximum(x + y, 0.0)


def make_params(key, inplanes, planes):
    ks = jax.random.split(key, 10)
    fan_a = inplanes * 9
    fan_b = planes * 9
    return {
        "conv_a_w": jax.random.normal(ks[0], (planes, inplanes, 3, 3), jnp.float32)
                    * np.sqrt(2.0 / fan_a),
        "conv_b_w": jax.random.normal(ks[1], (planes, planes, 3, 3), jnp.float32)
                    * np.sqrt(2.0 / fan_b),
        "bn_a_gamma": 1.0 + 0.1 * jax.random.normal(ks[2], (planes,), jnp.float32),
        "bn_a_beta": 0.1 * jax.random.normal(ks[3], (planes,), jnp.float32),
        "bn_a_mean": 0.1 * jax.random.normal(ks[4], (planes,), jnp.float32),
        "bn_a_var": jax.random.uniform(ks[5], (planes,), jnp.float32, 0.5, 1.5),
        "bn_b_gamma": 1.0 + 0.1 * jax.random.normal(ks[6], (planes,), jnp.float32),
        "bn_b_beta": 0.1 * jax.random.normal(ks[7], (planes,), jnp.float32),
        "bn_b_mean": 0.1 * jax.random.normal(ks[8], (planes,), jnp.float32),
        "bn_b_var": jax.random.uniform(ks[9], (planes,), jnp.float32, 0.5, 1.5),
    }


if __name__ == "__main__":
    key = jax.random.PRNGKey(0)
    k_x, k_p = jax.random.split(key)

    # inplanes == planes == 8, stride 1; W*C = 128 lanes; 4 images per grid step
    # -> grid length 4 (both v7x TensorCores get 2 pipelined steps each).
    N, C, H, W = 16, 8, 16, 16
    x = jax.random.normal(k_x, (N, C, H, W), jnp.float32)
    params = make_params(k_p, C, C)

    ref = jax.block_until_ready(reference_forward(x, params))

    # f32 conv path: tight check against the f32 XLA reference.
    out_f32 = jax.block_until_ready(
        resnet_basicblock(x, params, compute_dtype=jnp.float32, b_tile=4))
    np.testing.assert_allclose(np.asarray(out_f32), np.asarray(ref),
                               rtol=1e-4, atol=1e-4)

    # production bf16 path (f32 accumulation / epilogue / residual): loose check.
    out_bf16 = jax.block_until_ready(
        resnet_basicblock(x, params, compute_dtype=jnp.bfloat16, b_tile=4))
    np.testing.assert_allclose(np.asarray(out_bf16), np.asarray(ref),
                               rtol=1e-1, atol=1e-1)

    print("KERNEL_OK")
</pallas_src>

<mosaic_0001>
module attributes {stable_mosaic.version = 11 : i64} {
  func.func @_basicblock_kernel(%arg0: i32, %arg1: memref<72x128xf32, #tpu.memory_space<vmem>>, %arg2: memref<3x128x128xf32, #tpu.memory_space<vmem>>, %arg3: memref<3x128x128xf32, #tpu.memory_space<vmem>>, %arg4: memref<4x128xf32, #tpu.memory_space<vmem>>, %arg5: memref<70x1xf32, #tpu.memory_space<vmem>>, %arg6: memref<72x128xf32, #tpu.memory_space<vmem>>, %arg7: memref<72x128xf32, #tpu.memory_space<vmem>>) attributes {dimension_semantics = [#tpu.dimension_semantics<parallel>], iteration_bounds = array<i64: 4>, scalar_prefetch = 0 : i64, scratch_operands = 1 : i64, tpu.core_type = #tpu.core_type<tc>, window_params = [{transform_indices = @transform_0, window_bounds = array<i64: 72, 128>}, {pipeline_mode = #tpu.pipeline_mode<synchronous>, transform_indices = @transform_1, window_bounds = array<i64: 3, 128, 128>}, {pipeline_mode = #tpu.pipeline_mode<synchronous>, transform_indices = @transform_2, window_bounds = array<i64: 3, 128, 128>}, {pipeline_mode = #tpu.pipeline_mode<synchronous>, transform_indices = @transform_3, window_bounds = array<i64: 4, 128>}, {pipeline_mode = #tpu.pipeline_mode<synchronous>, transform_indices = @transform_4, window_bounds = array<i64: 70, 1>}, {transform_indices = @transform_5, window_bounds = array<i64: 72, 128>}]} {
    %c1 = arith.constant 1 : index
    %c0 = arith.constant 0 : index
    %0 = vector.load %arg1[%c1, %c0] : memref<72x128xf32, #tpu.memory_space<vmem>>, vector<70x128xf32>
    %c0_0 = arith.constant 0 : index
    %c0_1 = arith.constant 0 : index
    %1 = vector.load %arg5[%c0_0, %c0_1] : memref<70x1xf32, #tpu.memory_space<vmem>>, vector<70x1xf32>
    %c0_2 = arith.constant 0 : index
    %c0_3 = arith.constant 0 : index
    %2 = vector.load %arg1[%c0_2, %c0_3] : memref<72x128xf32, #tpu.memory_space<vmem>>, vector<70x128xf32>
    %c0_4 = arith.constant 0 : index
    %c0_5 = arith.constant 0 : index
    %c0_6 = arith.constant 0 : index
    %3 = vector.load %arg2[%c0_4, %c0_5, %c0_6] : memref<3x128x128xf32, #tpu.memory_space<vmem>>, vector<1x128x128xf32>
    %4 = vector.shape_cast %3 : vector<1x128x128xf32> to vector<128x128xf32>
    %cst = arith.constant dense<0.000000e+00> : vector<70x128xf32>
    %5 = tpu.matmul %2, %4, %cst {dimension_numbers = #tpu.dot_dimension_numbers<[1], [0], [0], [1], [0, 0, 1, 1], [], []>} : vector<70x128xf32>, vector<128x128xf32>, vector<70x128xf32> -> vector<70x128xf32>
    %c1_7 = arith.constant 1 : index
    %c0_8 = arith.constant 0 : index
    %c0_9 = arith.constant 0 : index
    %6 = vector.load %arg2[%c1_7, %c0_8, %c0_9] : memref<3x128x128xf32, #tpu.memory_space<vmem>>, vector<1x128x128xf32>
    %7 = vector.shape_cast %6 : vector<1x128x128xf32> to vector<128x128xf32>
    %cst_10 = arith.constant dense<0.000000e+00> : vector<70x128xf32>
    %8 = tpu.matmul %0, %7, %cst_10 {dimension_numbers = #tpu.dot_dimension_numbers<[1], [0], [0], [1], [0, 0, 1, 1], [], []>} : vector<70x128xf32>, vector<128x128xf32>, vector<70x128xf32> -> vector<70x128xf32>
    %9 = arith.addf %5, %8 : vector<70x128xf32>
    %c2 = arith.constant 2 : index
    %c0_11 = arith.constant 0 : index
    %10 = vector.load %arg1[%c2, %c0_11] : memref<72x128xf32, #tpu.memory_space<vmem>>, vector<70x128xf32>
    %c2_12 = arith.constant 2 : index
    %c0_13 = arith.constant 0 : index
    %c0_14 = arith.constant 0 : index
    %11 = vector.load %arg2[%c2_12, %c0_13, %c0_14] : memref<3x128x128xf32, #tpu.memory_space<vmem>>, vector<1x128x128xf32>
    %12 = vector.shape_cast %11 : vector<1x128x128xf32> to vector<128x128xf32>
    %cst_15 = arith.constant dense<0.000000e+00> : vector<70x128xf32>
    %13 = tpu.matmul %10, %12, %cst_15 {dimension_numbers = #tpu.dot_dimension_numbers<[1], [0], [0], [1], [0, 0, 1, 1], [], []>} : vector<70x128xf32>, vector<128x128xf32>, vector<70x128xf32> -> vector<70x128xf32>
    %14 = arith.addf %9, %13 : vector<70x128xf32>
    %c0_16 = arith.constant 0 : index
    %c0_17 = arith.constant 0 : index
    %15 = vector.load %arg4[%c0_16, %c0_17] : memref<4x128xf32, #tpu.memory_space<vmem>>, vector<1x128xf32>
    %16 = vector.broadcast %15 : vector<1x128xf32> to vector<70x128xf32>
    %17 = arith.mulf %14, %16 : vector<70x128xf32>
    %c1_18 = arith.constant 1 : index
    %c0_19 = arith.constant 0 : index
    %18 = vector.load %arg4[%c1_18, %c0_19] : memref<4x128xf32, #tpu.memory_space<vmem>>, vector<1x128xf32>
    %19 = vector.broadcast %18 : vector<1x128xf32> to vector<70x128xf32>
    %20 = arith.addf %17, %19 : vector<70x128xf32>
    %cst_20 = arith.constant 0.000000e+00 : f32
    %21 = vector.broadcast %cst_20 : f32 to vector<70x128xf32>
    %22 = arith.maximumf %20, %21 : vector<70x128xf32>
    %23 = vector.broadcast %1 : vector<70x1xf32> to vector<70x128xf32>
    %24 = arith.mulf %22, %23 : vector<70x128xf32>
    %cst_21 = arith.constant 0.000000e+00 : f32
    %25 = vector.broadcast %cst_21 : f32 to vector<1x128xf32>
    %c0_22 = arith.constant 0 : index
    %c0_23 = arith.constant 0 : index
    %26 = vector.load %arg7[%c0_22, %c0_23] : memref<72x128xf32, #tpu.memory_space<vmem>>, vector<1x128xf32>
    tpu.vector_store %arg7[%c0_22, %c0_23], %25 {strides = array<i32>} : memref<72x128xf32, #tpu.memory_space<vmem>>, vector<1x128xf32>,
    %cst_24 = arith.constant 0.000000e+00 : f32
    %27 = vector.broadcast %cst_24 : f32 to vector<1x128xf32>
    %c71 = arith.constant 71 : index
    %c0_25 = arith.constant 0 : index
    %28 = vector.load %arg7[%c71, %c0_25] : memref<72x128xf32, #tpu.memory_space<vmem>>, vector<1x128xf32>
    tpu.vector_store %arg7[%c71, %c0_25], %27 {strides = array<i32>} : memref<72x128xf32, #tpu.memory_space<vmem>>, vector<1x128xf32>,
    %c1_26 = arith.constant 1 : index
    %c0_27 = arith.constant 0 : index
    %29 = vector.load %arg7[%c1_26, %c0_27] : memref<72x128xf32, #tpu.memory_space<vmem>>, vector<70x128xf32>
    tpu.vector_store %arg7[%c1_26, %c0_27], %24 {strides = array<i32>} : memref<72x128xf32, #tpu.memory_space<vmem>>, vector<70x128xf32>,
    %c0_28 = arith.constant 0 : index
    %c0_29 = arith.constant 0 : index
    %30 = vector.load %arg7[%c0_28, %c0_29] : memref<72x128xf32, #tpu.memory_space<vmem>>, vector<70x128xf32>
    %c0_30 = arith.constant 0 : index
    %c0_31 = arith.constant 0 : index
    %c0_32 = arith.constant 0 : index
    %31 = vector.load %arg3[%c0_30, %c0_31, %c0_32] : memref<3x128x128xf32, #tpu.memory_space<vmem>>, vector<1x128x128xf32>
    %32 = vector.shape_cast %31 : vector<1x128x128xf32> to vector<128x128xf32>
    %cst_33 = arith.constant dense<0.000000e+00> : vector<70x128xf32>
    %33 = tpu.matmul %30, %32, %cst_33 {dimension_numbers = #tpu.dot_dimension_numbers<[1], [0], [0], [1], [0, 0, 1, 1], [], []>} : vector<70x128xf32>, vector<128x128xf32>, vector<70x128xf32> -> vector<70x128xf32>
    %c1_34 = arith.constant 1 : index
    %c0_35 = arith.constant 0 : index
    %34 = vector.load %arg7[%c1_34, %c0_35] : memref<72x128xf32, #tpu.memory_space<vmem>>, vector<70x128xf32>
    %c1_36 = arith.constant 1 : index
    %c0_37 = arith.constant 0 : index
    %c0_38 = arith.constant 0 : index
    %35 = vector.load %arg3[%c1_36, %c0_37, %c0_38] : memref<3x128x128xf32, #tpu.memory_space<vmem>>, vector<1x128x128xf32>
    %36 = vector.shape_cast %35 : vector<1x128x128xf32> to vector<128x128xf32>
    %cst_39 = arith.constant dense<0.000000e+00> : vector<70x128xf32>
    %37 = tpu.matmul %34, %36, %cst_39 {dimension_numbers = #tpu.dot_dimension_numbers<[1], [0], [0], [1], [0, 0, 1, 1], [], []>} : vector<70x128xf32>, vector<128x128xf32>, vector<70x128xf32> -> vector<70x128xf32>
    %38 = arith.addf %33, %37 : vector<70x128xf32>
    %c2_40 = arith.constant 2 : index
    %c0_41 = arith.constant 0 : index
    %39 = vector.load %arg7[%c2_40, %c0_41] : memref<72x128xf32, #tpu.memory_space<vmem>>, vector<70x128xf32>
    %c2_42 = arith.constant 2 : index
    %c0_43 = arith.constant 0 : index
    %c0_44 = arith.constant 0 : index
    %40 = vector.load %arg3[%c2_42, %c0_43, %c0_44] : memref<3x128x128xf32, #tpu.memory_space<vmem>>, vector<1x128x128xf32>
    %41 = vector.shape_cast %40 : vector<1x128x128xf32> to vector<128x128xf32>
    %cst_45 = arith.constant dense<0.000000e+00> : vector<70x128xf32>
    %42 = tpu.matmul %39, %41, %cst_45 {dimension_numbers = #tpu.dot_dimension_numbers<[1], [0], [0], [1], [0, 0, 1, 1], [], []>} : vector<70x128xf32>, vector<128x128xf32>, vector<70x128xf32> -> vector<70x128xf32>
    %43 = arith.addf %38, %42 : vector<70x128xf32>
    %c2_46 = arith.constant 2 : index
    %c0_47 = arith.constant 0 : index
    %44 = vector.load %arg4[%c2_46, %c0_47] : memref<4x128xf32, #tpu.memory_space<vmem>>, vector<1x128xf32>
    %45 = vector.broadcast %44 : vector<1x128xf32> to vector<70x128xf32>
    %46 = arith.mulf %43, %45 : vector<70x128xf32>
    %c3 = arith.constant 3 : index
    %c0_48 = arith.constant 0 : index
    %47 = vector.load %arg4[%c3, %c0_48] : memref<4x128xf32, #tpu.memory_space<vmem>>, vector<1x128xf32>
    %48 = vector.broadcast %47 : vector<1x128xf32> to vector<70x128xf32>
    %49 = arith.addf %46, %48 : vector<70x128xf32>
    %cst_49 = arith.constant 0.000000e+00 : f32
    %50 = vector.broadcast %cst_49 : f32 to vector<1x128xf32>
    %c0_50 = arith.constant 0 : index
    %c0_51 = arith.constant 0 : index
    %51 = vector.load %arg6[%c0_50, %c0_51] : memref<72x128xf32, #tpu.memory_space<vmem>>, vector<1x128xf32>
    tpu.vector_store %arg6[%c0_50, %c0_51], %50 {strides = array<i32>} : memref<72x128xf32, #tpu.memory_space<vmem>>, vector<1x128xf32>,
    %cst_52 = arith.constant 0.000000e+00 : f32
    %52 = vector.broadcast %cst_52 : f32 to vector<1x128xf32>
    %c71_53 = arith.constant 71 : index
    %c0_54 = arith.constant 0 : index
    %53 = vector.load %arg6[%c71_53, %c0_54] : memref<72x128xf32, #tpu.memory_space<vmem>>, vector<1x128xf32>
    tpu.vector_store %arg6[%c71_53, %c0_54], %52 {strides = array<i32>} : memref<72x128xf32, #tpu.memory_space<vmem>>, vector<1x128xf32>,
    %54 = arith.addf %0, %49 : vector<70x128xf32>
    %cst_55 = arith.constant 0.000000e+00 : f32
    %55 = vector.broadcast %cst_55 : f32 to vector<70x128xf32>
    %56 = arith.maximumf %54, %55 : vector<70x128xf32>
    %57 = vector.broadcast %1 : vector<70x1xf32> to vector<70x128xf32>
    %58 = arith.mulf %56, %57 : vector<70x128xf32>
    %c1_56 = arith.constant 1 : index
    %c0_57 = arith.constant 0 : index
    %59 = vector.load %arg6[%c1_56, %c0_57] : memref<72x128xf32, #tpu.memory_space<vmem>>, vector<70x128xf32>
    tpu.vector_store %arg6[%c1_56, %c0_57], %58 {strides = array<i32>} : memref<72x128xf32, #tpu.memory_space<vmem>>, vector<70x128xf32>,
    return
  }
  func.func @transform_0(%arg0: i32) -> (i32, i32) {
    %c0_i32 = arith.constant 0 : i32
    %c0_i32_0 = arith.constant 0 : i32
    return %arg0, %c0_i32 : i32, i32
  }
  func.func @transform_1(%arg0: i32) -> (i32, i32, i32) {
    %c0_i32 = arith.constant 0 : i32
    %c0_i32_0 = arith.constant 0 : i32
    %c0_i32_1 = arith.constant 0 : i32
    %c0_i32_2 = arith.constant 0 : i32
    return %c0_i32, %c0_i32_0, %c0_i32_1 : i32, i32, i32
  }
  func.func @transform_2(%arg0: i32) -> (i32, i32, i32) {
    %c0_i32 = arith.constant 0 : i32
    %c0_i32_0 = arith.constant 0 : i32
    %c0_i32_1 = arith.constant 0 : i32
    %c0_i32_2 = arith.constant 0 : i32
    return %c0_i32, %c0_i32_0, %c0_i32_1 : i32, i32, i32
  }
  func.func @transform_3(%arg0: i32) -> (i32, i32) {
    %c0_i32 = arith.constant 0 : i32
    %c0_i32_0 = arith.constant 0 : i32
    %c0_i32_1 = arith.constant 0 : i32
    return %c0_i32, %c0_i32_0 : i32, i32
  }
  func.func @transform_4(%arg0: i32) -> (i32, i32) {
    %c0_i32 = arith.constant 0 : i32
    %c0_i32_0 = arith.constant 0 : i32
    %c0_i32_1 = arith.constant 0 : i32
    return %c0_i32, %c0_i32_0 : i32, i32
  }
  func.func @transform_5(%arg0: i32) -> (i32, i32) {
    %c0_i32 = arith.constant 0 : i32
    %c0_i32_0 = arith.constant 0 : i32
    return %arg0, %c0_i32 : i32, i32
  }
}

</mosaic_0001>

<llo_original>
// kernel: tpu_custom_call.1
$region0: #{tpu_custom_call.1}
  #allocation0 [shape = 'u32[]', space=smem, size = 0x4, offset = 0x4, fixed_abs, tag = 'smem constant byte address 0x4 - core index']
  #allocation1 [shape = 'u32[72,128]{1,0:T(1,128)}', space=vmem, size = 0x9000, scoped, tag = 'internal scratch']
  #allocation2 [shape = 'f32[72,128]{1,0:T(8,128)}', space=vmem, size = 0x9000, scoped, tag = 'scratch operand']
  %s0 = inlined_call_operand.hbm [shape: f32[288,128], index: 0, kind: input, shape index: {}]
  %s1 = inlined_call_operand.hbm [shape: f32[3,128,128], index: 1, kind: input, shape index: {}]
  %s2 = inlined_call_operand.hbm [shape: f32[3,128,128], index: 2, kind: input, shape index: {}]
  %s3 = inlined_call_operand.vmem [shape: f32[4,128], index: 3, kind: input, shape index: {}]
  %s4 = inlined_call_operand.vmem [shape: f32[70,1], index: 4, kind: input, shape index: {}]
  %s5 = inlined_call_operand.hbm [shape: f32[288,128], index: 5, kind: output, shape index: {}]
  %s6 = sld [smem:[#allocation0]]
  $region65: #{tpu_custom_call.1} parent=0
    _
  %s8 = ssub.s32 1, %s6
  %s9 = scalar_select 0, %s8, %s6
  $region1: #{tpu_custom_call.1} parent=0
    #allocation3 [shape = 'u8[73728]{0}', space=vmem, size = 0x12000, scoped, tag = 'input window, operand 0']
    #allocation4 [shape = 's32[2]{0}', space=sflag, size = 0x8, scoped, tag = 'scoped memory for tpu_custom_call.1']
    #allocation5 [shape = 's32[2]{0}', space=sflag, size = 0x8, scoped, tag = 'scoped memory for tpu_custom_call.1']
    #allocation6 [shape = 'u8[196608]{0}', space=vmem, size = 0x30000, scoped, tag = 'input window, operand 1, single buffered']
    #allocation7 [shape = 's32[1]{0}', space=sflag, size = 0x4, scoped, tag = 'scoped memory for tpu_custom_call.1']
    #allocation8 [shape = 'u8[196608]{0}', space=vmem, size = 0x30000, scoped, tag = 'input window, operand 2, single buffered']
    #allocation9 [shape = 'u8[73728]{0}', space=vmem, size = 0x12000, scoped, tag = 'output window, operand 0']
    %10 = vsyncpa [#allocation4], 0
    %s11 = scalar_lea.sflag [#allocation4], 1
    %12 = vsyncpa %s11, 0
    %13 = vsyncpa [#allocation7], 0
    %14 = vsyncpa [#allocation5], 0
    %s15 = scalar_lea.sflag [#allocation5], 1
    %16 = vsyncpa %s15, 0
    loop: start=0, step=1, limit=6
    $region2: #{tpu_custom_call.1} parent=1 // loop_pre_header
      _
    $region3: #{tpu_custom_call.1} parent=1 // loop_header
      %s18 = sphi 0, %s22
      %p19 = scmp.ge.s32.totalorder %s18, 6
      %s28 = sphi 0, %s30
      %s31 = sphi 0, %s28
      %s32 = sphi 0, %s31
      %s48 = sphi 0, %s32
      %s52 = sphi 0, %s52
      %s54 = sphi 0, %s52
      %s55 = sphi 0, %s54
      %s69 = sphi 0, %s55
      %s73 = sphi 0, %s73
      %s75 = sphi 0, %s73
      %s76 = sphi 0, %s75
      %s90 = sphi 0, %s76
      %s94 = sphi 0, %s94
      %s96 = sphi 0, %s94
      %s97 = sphi 0, %s96
      %s111 = sphi 0, %s97
      %s115 = sphi 0, %s115
      %s117 = sphi 0, %s115
      %s118 = sphi 0, %s117
      %s132 = sphi 0, %s118
      %s138 = sphi 0, %s140
      %s141 = sphi 0, %s138
      %s142 = sphi 0, %s141
      %s158 = sphi 0, %s142
    $region4: #{tpu_custom_call.1} parent=1 // loop_header_branch
      %21 = sbr.rel (%p19) target = $region8
    $region5: #{tpu_custom_call.1} parent=1 // loop_body
      %s23 = ssub.s32 %s18, 1
      %s24 = ssub.s32 %s18, 2
      %s25 = sadd.s32 %s18, 1
      %s26 = ssub.s32 %s18, %s25
      %p27 = scmp.eq.s32.totalorder %s26, 0
      %s29 = sadd.s32 %s28, 1
      %s30 = scalar_select %p27, %s28, %s29
      %p33 = pneg %p27
      %p34 = scmp.eq.s32.totalorder %s18, 3
      %p35 = por %p33, %p34
      %p36 = scmp.ne.s32.totalorder %s28, %s31
      %p37 = scmp.eq.s32.totalorder %s18, 0
      %p38 = por %p36, %p37
      %p39 = scmp.ne.s32.totalorder %s28, %s31
      %p40 = scmp.eq.s32.totalorder %s23, 3
      %p41 = por %p39, %p40
      %p42 = scmp.ne.s32.totalorder %s31, %s32
      %p43 = scmp.eq.s32.totalorder %s23, 0
      %p44 = por %p42, %p43
      %p45 = scmp.ne.s32.totalorder %s31, %s32
      %p46 = scmp.eq.s32.totalorder %s24, 3
      %p47 = por %p45, %p46
      %p49 = scmp.ne.s32.totalorder %s32, %s48
      %p50 = scmp.eq.s32.totalorder %s24, 0
      %p51 = por %p49, %p50
      %s53 = sadd.s32 %s52, 1
      %p56 = scmp.eq.s32.totalorder %s18, 3
      %p57 = scmp.ne.s32.totalorder %s52, %s54
      %p58 = scmp.eq.s32.totalorder %s18, 0
      %p59 = por %p57, %p58
      %p60 = scmp.ne.s32.totalorder %s52, %s54
      %p61 = scmp.eq.s32.totalorder %s23, 3
      %p62 = por %p60, %p61
      %p63 = scmp.ne.s32.totalorder %s54, %s55
      %p64 = scmp.eq.s32.totalorder %s23, 0
      %p65 = por %p63, %p64
      %p66 = scmp.ne.s32.totalorder %s54, %s55
      %p67 = scmp.eq.s32.totalorder %s24, 3
      %p68 = por %p66, %p67
      %p70 = scmp.ne.s32.totalorder %s55, %s69
      %p71 = scmp.eq.s32.totalorder %s24, 0
      %p72 = por %p70, %p71
      %s74 = sadd.s32 %s73, 1
      %p77 = scmp.eq.s32.totalorder %s18, 3
      %p78 = scmp.ne.s32.totalorder %s73, %s75
      %p79 = scmp.eq.s32.totalorder %s18, 0
      %p80 = por %p78, %p79
      %p81 = scmp.ne.s32.totalorder %s73, %s75
      %p82 = scmp.eq.s32.totalorder %s23, 3
      %p83 = por %p81, %p82
      %p84 = scmp.ne.s32.totalorder %s75, %s76
      %p85 = scmp.eq.s32.totalorder %s23, 0
      %p86 = por %p84, %p85
      %p87 = scmp.ne.s32.totalorder %s75, %s76
      %p88 = scmp.eq.s32.totalorder %s24, 3
      %p89 = por %p87, %p88
      %p91 = scmp.ne.s32.totalorder %s76, %s90
      %p92 = scmp.eq.s32.totalorder %s24, 0
      %p93 = por %p91, %p92
      %s95 = sadd.s32 %s94, 1
      %p98 = scmp.eq.s32.totalorder %s18, 3
      %p99 = scmp.ne.s32.totalorder %s94, %s96
      %p100 = scmp.eq.s32.totalorder %s18, 0
      %p101 = por %p99, %p100
      %p102 = scmp.ne.s32.totalorder %s94, %s96
      %p103 = scmp.eq.s32.totalorder %s23, 3
      %p104 = por %p102, %p103
      %p105 = scmp.ne.s32.totalorder %s96, %s97
      %p106 = scmp.eq.s32.totalorder %s23, 0
      %p107 = por %p105, %p106
      %p108 = scmp.ne.s32.totalorder %s96, %s97
      %p109 = scmp.eq.s32.totalorder %s24, 3
      %p110 = por %p108, %p109
      %p112 = scmp.ne.s32.totalorder %s97, %s111
      %p113 = scmp.eq.s32.totalorder %s24, 0
      %p114 = por %p112, %p113
      %s116 = sadd.s32 %s115, 1
      %p119 = scmp.eq.s32.totalorder %s18, 3
      %p120 = scmp.ne.s32.totalorder %s115, %s117
      %p121 = scmp.eq.s32.totalorder %s18, 0
      %p122 = por %p120, %p121
      %p123 = scmp.ne.s32.totalorder %s115, %s117
      %p124 = scmp.eq.s32.totalorder %s23, 3
      %p125 = por %p123, %p124
      %p126 = scmp.ne.s32.totalorder %s117, %s118
      %p127 = scmp.eq.s32.totalorder %s23, 0
      %p128 = por %p126, %p127
      %p129 = scmp.ne.s32.totalorder %s117, %s118
      %p130 = scmp.eq.s32.totalorder %s24, 3
      %p131 = por %p129, %p130
      %p133 = scmp.ne.s32.totalorder %s118, %s132
      %p134 = scmp.eq.s32.totalorder %s24, 0
      %p135 = por %p133, %p134
      %s136 = ssub.s32 %s18, %s25
      %p137 = scmp.eq.s32.totalorder %s136, 0
      %s139 = sadd.s32 %s138, 1
      %s140 = scalar_select %p137, %s138, %s139
      %p143 = pneg %p137
      %p144 = scmp.eq.s32.totalorder %s18, 3
      %p145 = por %p143, %p144
      %p146 = scmp.ne.s32.totalorder %s138, %s141
      %p147 = scmp.eq.s32.totalorder %s18, 0
      %p148 = por %p146, %p147
      %p149 = scmp.ne.s32.totalorder %s138, %s141
      %p150 = scmp.eq.s32.totalorder %s23, 3
      %p151 = por %p149, %p150
      %p152 = scmp.ne.s32.totalorder %s141, %s142
      %p153 = scmp.eq.s32.totalorder %s23, 0
      %p154 = por %p152, %p153
      %p155 = scmp.ne.s32.totalorder %s141, %s142
      %p156 = scmp.eq.s32.totalorder %s24, 3
      %p157 = por %p155, %p156
      %p159 = scmp.ne.s32.totalorder %s142, %s158
      %p160 = scmp.eq.s32.totalorder %s24, 0
      %p161 = por %p159, %p160
      %p162 = scmp.le.s32.totalorder 1, %s18
      %p163 = scmp.lt.s32.totalorder %s18, 5
      %p164 = pnand %p162, %p163
      %p165 = pneg %p164
      // Predicated region
      $region9: #{tpu_custom_call.1} parent=5 // pred_check
        _
      $region10: #{tpu_custom_call.1} parent=5 // pred_check_branch
        %167 = sbr.rel (%p164) target = $region12
      $region11: #{tpu_custom_call.1} parent=5 // pred_region
        %s168 = ssub.s32 %s18, 1
        // Predicated region
        $region13: #{tpu_custom_call.1} parent=11 // pred_check
          %p169 = pneg %p65
        $region14: #{tpu_custom_call.1} parent=11 // pred_check_branch
          %171 = sbr.rel (%p169) target = $region16
        $region15: #{tpu_custom_call.1} parent=11 // pred_region
          %173 = vsyncadd [#allocation7], 0
          %s174 = sshll.u32 %s1, 4
          %s175 = int_to_ptr.hbm [resolvable:$true] %s174
          %s176 = sshll.u32 [#allocation6], 4
          %s177 = int_to_ptr.vmem [resolvable:$true] %s176
          %182 = dma.hbm_to_vmem [thread:$0]  %s175, 6144, %s177, [#allocation7], 128, 128, 8
        $region16: #{tpu_custom_call.1} parent=11 // pred_fallthru
          _
        // Predicated region
        $region17: #{tpu_custom_call.1} parent=11 // pred_check
          %p183 = pneg %p86
        $region18: #{tpu_custom_call.1} parent=11 // pred_check_branch
          %185 = sbr.rel (%p183) target = $region20
        $region19: #{tpu_custom_call.1} parent=11 // pred_region
          %187 = vsyncadd [#allocation7], 0
          %s188 = sshll.u32 %s2, 4
          %s189 = int_to_ptr.hbm [resolvable:$true] %s188
          %s190 = sshll.u32 [#allocation8], 4
          %s191 = int_to_ptr.vmem [resolvable:$true] %s190
          %196 = dma.hbm_to_vmem [thread:$0]  %s189, 6144, %s191, [#allocation7], 128, 128, 8
        $region20: #{tpu_custom_call.1} parent=11 // pred_fallthru
          _
        // Predicated region
        $region21: #{tpu_custom_call.1} parent=11 // pred_check
          %p197 = pneg %p107
        $region22: #{tpu_custom_call.1} parent=11 // pred_check_branch
          %199 = sbr.rel (%p197) target = $region24
        $region23: #{tpu_custom_call.1} parent=11 // pred_region
          _
        $region24: #{tpu_custom_call.1} parent=11 // pred_fallthru
          _
        // Predicated region
        $region25: #{tpu_custom_call.1} parent=11 // pred_check
          %p200 = pneg %p128
        $region26: #{tpu_custom_call.1} parent=11 // pred_check_branch
          %202 = sbr.rel (%p200) target = $region28
        $region27: #{tpu_custom_call.1} parent=11 // pred_region
          _
        $region28: #{tpu_custom_call.1} parent=11 // pred_fallthru
          _
      $region12: #{tpu_custom_call.1} parent=5 // pred_fallthru
        _
      %p203 = scmp.lt.s32.totalorder %s18, 4
      // Predicated region
      $region29: #{tpu_custom_call.1} parent=5 // pred_check
        %p204 = pneg %p203
      $region30: #{tpu_custom_call.1} parent=5 // pred_check_branch
        %206 = sbr.rel (%p204) target = $region32
      $region31: #{tpu_custom_call.1} parent=5 // pred_region
        // Predicated region
        $region33: #{tpu_custom_call.1} parent=31 // pred_check
          %p207 = pneg %p38
        $region34: #{tpu_custom_call.1} parent=31 // pred_check_branch
          %209 = sbr.rel (%p207) target = $region36
        $region35: #{tpu_custom_call.1} parent=31 // pred_region
          %s210 = sand.u32 %s28, 1
          %s211 = scalar_lea.sflag [#allocation4], %s210
          %s212 = sand.u32 %s28, 1
          %s213 = smul.addr %s212, 72
          %s214 = scalar_lea.vmem [#allocation3], %s213
          %s215 = smul.u32 9, %s18
          %217 = vsyncadd %s211, 0
          %s218 = smul.addr %s215, 8
          %s219 = scalar_lea.hbm %s0, %s218
          %s220 = sshll.u32 %s219, 4
          %s221 = int_to_ptr.hbm [resolvable:$true] %s220
          %s222 = sshll.u32 %s214, 4
          %s223 = int_to_ptr.vmem [resolvable:$true] %s222
          %228 = dma.hbm_to_vmem [thread:$0]  %s221, 1152, %s223, %s211, 128, 128, 8
        $region36: #{tpu_custom_call.1} parent=31 // pred_fallthru
          _
      $region32: #{tpu_custom_call.1} parent=5 // pred_fallthru
        _
      %p229 = scmp.le.s32.totalorder 1, %s18
      %p230 = scmp.lt.s32.totalorder %s18, 5
      %p231 = pnand %p229, %p230
      %p232 = pneg %p231
      // Predicated region
      $region37: #{tpu_custom_call.1} parent=5 // pred_check
        _
      $region38: #{tpu_custom_call.1} parent=5 // pred_check_branch
        %234 = sbr.rel (%p231) target = $region40
      $region39: #{tpu_custom_call.1} parent=5 // pred_region
        %s235 = ssub.s32 %s18, 1
        %s236 = sand.u32 %s31, 1
        %s237 = scalar_lea.sflag [#allocation4], %s236
        %s238 = sand.u32 %s31, 1
        %s239 = smul.addr %s238, 72
        %s240 = scalar_lea.vmem [#allocation3], %s239
        // Predicated region
        $region41: #{tpu_custom_call.1} parent=39 // pred_check
          %p241 = pneg %p44
        $region42: #{tpu_custom_call.1} parent=39 // pred_check_branch
          %243 = sbr.rel (%p241) target = $region44
        $region43: #{tpu_custom_call.1} parent=39 // pred_region
          %245 = dma.done %s237, 1152
        $region44: #{tpu_custom_call.1} parent=39 // pred_fallthru
          _
        // Predicated region
        $region45: #{tpu_custom_call.1} parent=39 // pred_check
          %p246 = pneg %p65
        $region46: #{tpu_custom_call.1} parent=39 // pred_check_branch
          %248 = sbr.rel (%p246) target = $region48
        $region47: #{tpu_custom_call.1} parent=39 // pred_region
          %250 = dma.done [#allocation7], 6144
        $region48: #{tpu_custom_call.1} parent=39 // pred_fallthru
          _
        // Predicated region
        $region49: #{tpu_custom_call.1} parent=39 // pred_check
          %p251 = pneg %p86
        $region50: #{tpu_custom_call.1} parent=39 // pred_check_branch
          %253 = sbr.rel (%p251) target = $region52
        $region51: #{tpu_custom_call.1} parent=39 // pred_region
          %255 = dma.done [#allocation7], 6144
        $region52: #{tpu_custom_call.1} parent=39 // pred_fallthru
          _
        %s256 = sand.u32 %s31, 1
        %s257 = scalar_lea.sflag [#allocation4], %s256
        %s258 = sand.u32 %s31, 1
        %s259 = smul.addr %s258, 72
        %s260 = scalar_lea.vmem [#allocation3], %s259
        %p261 = pneg %p44
        %p262 = pneg %p41
        %p263 = pneg %p65
        %p264 = pneg %p62
        %p265 = pneg %p86
        %p266 = pneg %p83
        %p267 = pneg %p107
        %p268 = pneg %p104
        %p269 = pneg %p128
        %p270 = pneg %p125
        %p271 = pneg %p154
        %p272 = pneg %p151
        %s273 = sand.u32 %s141, 1
        %s274 = scalar_lea.sflag [#allocation5], %s273
        %s275 = sand.u32 %s141, 1
        %s276 = smul.addr %s275, 72
        %s277 = scalar_lea.vmem [#allocation9], %s276
        %s278 = smul.u32 9, %s23
        %s279 = smul.u32 9, %s23
        %v280 = vld [vmem:[%s240 + $0x1] sm:$0xff]
        %v281 = vld [vmem:[%s240 + $0x9] sm:$0xff]
        %v282 = vld [vmem:[%s240 + $0x11] sm:$0xff]
        %v283 = vld [vmem:[%s240 + $0x19] sm:$0xff]
        %v284 = vld [vmem:[%s240 + $0x21] sm:$0xff]
        %v285 = vld [vmem:[%s240 + $0x29] sm:$0xff]
        %v286 = vld [vmem:[%s240 + $0x31] sm:$0xff]
        %v287 = vld [vmem:[%s240 + $0x39] sm:$0xff]
        %v288 = vld [vmem:[%s240 + $0x41] sm:$0x3f]
        %v289 = vld [vmem:[%s4] sm:$0xff]
        %v290 = vld [vmem:[%s4 + $0x8] sm:$0xff]
        %v291 = vld [vmem:[%s4 + $0x10] sm:$0xff]
        %v292 = vld [vmem:[%s4 + $0x18] sm:$0xff]
        %v293 = vld [vmem:[%s4 + $0x20] sm:$0xff]
        %v294 = vld [vmem:[%s4 + $0x28] sm:$0xff]
        %v295 = vld [vmem:[%s4 + $0x30] sm:$0xff]
        %v296 = vld [vmem:[%s4 + $0x38] sm:$0xff]
        %v297 = vld [vmem:[%s4 + $0x40] sm:$0x3f]
        %v298 = vld [vmem:[%s240] sm:$0xff]
        %v299 = vld [vmem:[%s240 + $0x8] sm:$0xff]
        %v300 = vld [vmem:[%s240 + $0x10] sm:$0xff]
        %v301 = vld [vmem:[%s240 + $0x18] sm:$0xff]
        %v302 = vld [vmem:[%s240 + $0x20] sm:$0xff]
        %v303 = vld [vmem:[%s240 + $0x28] sm:$0xff]
        %v304 = vld [vmem:[%s240 + $0x30] sm:$0xff]
        %v305 = vld [vmem:[%s240 + $0x38] sm:$0xff]
        %v306 = vld [vmem:[%s240 + $0x40] sm:$0x3f]
        %v307 = vld [vmem:[#allocation6] sm:$0xff]
        %v308 = vld [vmem:[#allocation6 + $0x8] sm:$0xff]
        %v309 = vld [vmem:[#allocation6 + $0x10] sm:$0xff]
        %v310 = vld [vmem:[#allocation6 + $0x18] sm:$0xff]
        %v311 = vld [vmem:[#allocation6 + $0x20] sm:$0xff]
        %v312 = vld [vmem:[#allocation6 + $0x28] sm:$0xff]
        %v313 = vld [vmem:[#allocation6 + $0x30] sm:$0xff]
        %v314 = vld [vmem:[#allocation6 + $0x38] sm:$0xff]
        %v315 = vld [vmem:[#allocation6 + $0x40] sm:$0xff]
        %v316 = vld [vmem:[#allocation6 + $0x48] sm:$0xff]
        %v317 = vld [vmem:[#allocation6 + $0x50] sm:$0xff]
        %v318 = vld [vmem:[#allocation6 + $0x58] sm:$0xff]
        %v319 = vld [vmem:[#allocation6 + $0x60] sm:$0xff]
        %v320 = vld [vmem:[#allocation6 + $0x68] sm:$0xff]
        %v321 = vld [vmem:[#allocation6 + $0x70] sm:$0xff]
        %v322 = vld [vmem:[#allocation6 + $0x78] sm:$0xff]
        %s323 = scalar_lea.vmem [#allocation6], 128
        %v324 = vld [vmem:[%s323] sm:$0xff]
        %v325 = vld [vmem:[%s323 + $0x8] sm:$0xff]
        %v326 = vld [vmem:[%s323 + $0x10] sm:$0xff]
        %v327 = vld [vmem:[%s323 + $0x18] sm:$0xff]
        %v328 = vld [vmem:[%s323 + $0x20] sm:$0xff]
        %v329 = vld [vmem:[%s323 + $0x28] sm:$0xff]
        %v330 = vld [vmem:[%s323 + $0x30] sm:$0xff]
        %v331 = vld [vmem:[%s323 + $0x38] sm:$0xff]
        %v332 = vld [vmem:[%s323 + $0x40] sm:$0xff]
        %v333 = vld [vmem:[%s323 + $0x48] sm:$0xff]
        %v334 = vld [vmem:[%s323 + $0x50] sm:$0xff]
        %v335 = vld [vmem:[%s323 + $0x58] sm:$0xff]
        %v336 = vld [vmem:[%s323 + $0x60] sm:$0xff]
        %v337 = vld [vmem:[%s323 + $0x68] sm:$0xff]
        %v338 = vld [vmem:[%s323 + $0x70] sm:$0xff]
        %v339 = vld [vmem:[%s323 + $0x78] sm:$0xff]
        %340 = vmatpush.msra.mxu0 %v339
        %341 = vmatpush.msra.mxu0 %v338
        %342 = vmatpush.msra.mxu0 %v337
        %343 = vmatpush.msra.mxu0 %v336
        %344 = vmatpush.msra.mxu0 %v335
        %345 = vmatpush.msra.mxu0 %v334
        %346 = vmatpush.msra.mxu0 %v333
        %347 = vmatpush.msra.mxu0 %v332
        %348 = vmatpush.msra.mxu0 %v331
        %349 = vmatpush.msra.mxu0 %v330
        %350 = vmatpush.msra.mxu0 %v329
        %351 = vmatpush.msra.mxu0 %v328
        %352 = vmatpush.msra.mxu0 %v327
        %353 = vmatpush.msra.mxu0 %v326
        %354 = vmatpush.msra.mxu0 %v325
        %355 = vmatpush.msra.mxu0 %v324
        %356 = vmatmul.f32.gmra.mxu0 %v280
        %v357 = vpop.f32.mrf.mxu0
        %v358 = vadd.f32 0.0, %v357
        %359 = vmatmul.f32.gmra.mxu0 %v281
        %v360 = vpop.f32.mrf.mxu0
        %v361 = vadd.f32 0.0, %v360
        %362 = vmatmul.f32.gmra.mxu0 %v282
        %v363 = vpop.f32.mrf.mxu0
        %v364 = vadd.f32 0.0, %v363
        %365 = vmatmul.f32.gmra.mxu0 %v283
        %v366 = vpop.f32.mrf.mxu0
        %v367 = vadd.f32 0.0, %v366
        %368 = vmatmul.f32.gmra.mxu0 %v284
        %v369 = vpop.f32.mrf.mxu0
        %v370 = vadd.f32 0.0, %v369
        %371 = vmatmul.f32.gmra.mxu0 %v285
        %v372 = vpop.f32.mrf.mxu0
        %v373 = vadd.f32 0.0, %v372
        %374 = vmatmul.f32.gmra.mxu0 %v286
        %v375 = vpop.f32.mrf.mxu0
        %v376 = vadd.f32 0.0, %v375
        %377 = vmatmul.f32.gmra.mxu0 %v287
        %v378 = vpop.f32.mrf.mxu0
        %v379 = vadd.f32 0.0, %v378
        %380 = vmatmul.f32.gmra.mxu0 %v288
        %v381 = vpop.f32.mrf.mxu0
        %v382 = vadd.f32 0.0, %v381
        %383 = vdwg.mxu0
        %384 = vmatpush.msra.mxu0 %v322
        %385 = vmatpush.msra.mxu0 %v321
        %386 = vmatpush.msra.mxu0 %v320
        %387 = vmatpush.msra.mxu0 %v319
        %388 = vmatpush.msra.mxu0 %v318
        %389 = vmatpush.msra.mxu0 %v317
        %390 = vmatpush.msra.mxu0 %v316
        %391 = vmatpush.msra.mxu0 %v315
        %392 = vmatpush.msra.mxu0 %v314
        %393 = vmatpush.msra.mxu0 %v313
        %394 = vmatpush.msra.mxu0 %v312
        %395 = vmatpush.msra.mxu0 %v311
        %396 = vmatpush.msra.mxu0 %v310
        %397 = vmatpush.msra.mxu0 %v309
        %398 = vmatpush.msra.mxu0 %v308
        %399 = vmatpush.msra.mxu0 %v307
        %400 = vmatmul.f32.gmra.mxu0 %v298
        %v401 = vpop.f32.mrf.mxu0
        %v402 = vadd.f32 %v358, %v401
        %403 = vmatmul.f32.gmra.mxu0 %v299
        %v404 = vpop.f32.mrf.mxu0
        %v405 = vadd.f32 %v361, %v404
        %406 = vmatmul.f32.gmra.mxu0 %v300
        %v407 = vpop.f32.mrf.mxu0
        %v408 = vadd.f32 %v364, %v407
        %409 = vmatmul.f32.gmra.mxu0 %v301
        %v410 = vpop.f32.mrf.mxu0
        %v411 = vadd.f32 %v367, %v410
        %412 = vmatmul.f32.gmra.mxu0 %v302
        %v413 = vpop.f32.mrf.mxu0
        %v414 = vadd.f32 %v370, %v413
        %415 = vmatmul.f32.gmra.mxu0 %v303
        %v416 = vpop.f32.mrf.mxu0
        %v417 = vadd.f32 %v373, %v416
        %418 = vmatmul.f32.gmra.mxu0 %v304
        %v419 = vpop.f32.mrf.mxu0
        %v420 = vadd.f32 %v376, %v419
        %421 = vmatmul.f32.gmra.mxu0 %v305
        %v422 = vpop.f32.mrf.mxu0
        %v423 = vadd.f32 %v379, %v422
        %424 = vmatmul.f32.gmra.mxu0 %v306
        %v425 = vpop.f32.mrf.mxu0
        %v426 = vadd.f32 %v382, %v425
        %427 = vdwg.mxu0
        %v428 = vld [vmem:[%s240 + $0x2] sm:$0xff]
        %v429 = vld [vmem:[%s240 + $0xa] sm:$0xff]
        %v430 = vld [vmem:[%s240 + $0x12] sm:$0xff]
        %v431 = vld [vmem:[%s240 + $0x1a] sm:$0xff]
        %v432 = vld [vmem:[%s240 + $0x22] sm:$0xff]
        %v433 = vld [vmem:[%s240 + $0x2a] sm:$0xff]
        %v434 = vld [vmem:[%s240 + $0x32] sm:$0xff]
        %v435 = vld [vmem:[%s240 + $0x3a] sm:$0xff]
        %v436 = vld [vmem:[%s240 + $0x42] sm:$0x3f]
        %s437 = scalar_lea.vmem [#allocation6], 256
        %v438 = vld [vmem:[%s437] sm:$0xff]
        %v439 = vld [vmem:[%s437 + $0x8] sm:$0xff]
        %v440 = vld [vmem:[%s437 + $0x10] sm:$0xff]
        %v441 = vld [vmem:[%s437 + $0x18] sm:$0xff]
        %v442 = vld [vmem:[%s437 + $0x20] sm:$0xff]
        %v443 = vld [vmem:[%s437 + $0x28] sm:$0xff]
        %v444 = vld [vmem:[%s437 + $0x30] sm:$0xff]
        %v445 = vld [vmem:[%s437 + $0x38] sm:$0xff]
        %v446 = vld [vmem:[%s437 + $0x40] sm:$0xff]
        %v447 = vld [vmem:[%s437 + $0x48] sm:$0xff]
        %v448 = vld [vmem:[%s437 + $0x50] sm:$0xff]
        %v449 = vld [vmem:[%s437 + $0x58] sm:$0xff]
        %v450 = vld [vmem:[%s437 + $0x60] sm:$0xff]
        %v451 = vld [vmem:[%s437 + $0x68] sm:$0xff]
        %v452 = vld [vmem:[%s437 + $0x70] sm:$0xff]
        %v453 = vld [vmem:[%s437 + $0x78] sm:$0xff]
        %454 = vmatpush.msra.mxu0 %v453
        %455 = vmatpush.msra.mxu0 %v452
        %456 = vmatpush.msra.mxu0 %v451
        %457 = vmatpush.msra.mxu0 %v450
        %458 = vmatpush.msra.mxu0 %v449
        %459 = vmatpush.msra.mxu0 %v448
        %460 = vmatpush.msra.mxu0 %v447
        %461 = vmatpush.msra.mxu0 %v446
        %462 = vmatpush.msra.mxu0 %v445
        %463 = vmatpush.msra.mxu0 %v444
        %464 = vmatpush.msra.mxu0 %v443
        %465 = vmatpush.msra.mxu0 %v442
        %466 = vmatpush.msra.mxu0 %v441
        %467 = vmatpush.msra.mxu0 %v440
        %468 = vmatpush.msra.mxu0 %v439
        %469 = vmatpush.msra.mxu0 %v438
        %470 = vmatmul.f32.gmra.mxu0 %v428
        %v471 = vpop.f32.mrf.mxu0
        %v472 = vadd.f32 0.0, %v471
        %473 = vmatmul.f32.gmra.mxu0 %v429
        %v474 = vpop.f32.mrf.mxu0
        %v475 = vadd.f32 0.0, %v474
        %476 = vmatmul.f32.gmra.mxu0 %v430
        %v477 = vpop.f32.mrf.mxu0
        %v478 = vadd.f32 0.0, %v477
        %479 = vmatmul.f32.gmra.mxu0 %v431
        %v480 = vpop.f32.mrf.mxu0
        %v481 = vadd.f32 0.0, %v480
        %482 = vmatmul.f32.gmra.mxu0 %v432
        %v483 = vpop.f32.mrf.mxu0
        %v484 = vadd.f32 0.0, %v483
        %485 = vmatmul.f32.gmra.mxu0 %v433
        %v486 = vpop.f32.mrf.mxu0
        %v487 = vadd.f32 0.0, %v486
        %488 = vmatmul.f32.gmra.mxu0 %v434
        %v489 = vpop.f32.mrf.mxu0
        %v490 = vadd.f32 0.0, %v489
        %491 = vmatmul.f32.gmra.mxu0 %v435
        %v492 = vpop.f32.mrf.mxu0
        %v493 = vadd.f32 0.0, %v492
        %494 = vmatmul.f32.gmra.mxu0 %v436
        %v495 = vpop.f32.mrf.mxu0
        %v496 = vadd.f32 0.0, %v495
        %497 = vdwg.mxu0
        %v498 = vadd.f32 %v402, %v472
        %v499 = vadd.f32 %v405, %v475
        %v500 = vadd.f32 %v408, %v478
        %v501 = vadd.f32 %v411, %v481
        %v502 = vadd.f32 %v414, %v484
        %v503 = vadd.f32 %v417, %v487
        %v504 = vadd.f32 %v420, %v490
        %v505 = vadd.f32 %v423, %v493
        %v506 = vadd.f32 %v426, %v496
        %v507 = vld [vmem:[%s3] sm:$0x1]
        %v508 = vperm.slane %v507, 0
        %v509 = vmul.f32 %v498, %v508
        %v510 = vmul.f32 %v499, %v508
        %v511 = vmul.f32 %v500, %v508
        %v512 = vmul.f32 %v501, %v508
        %v513 = vmul.f32 %v502, %v508
        %v514 = vmul.f32 %v503, %v508
        %v515 = vmul.f32 %v504, %v508
        %v516 = vmul.f32 %v505, %v508
        %v517 = vmul.f32 %v506, %v508
        %v518 = vld [vmem:[%s3 + $0x1] sm:$0x1]
        %v519 = vperm.slane %v518, 0
        %v520 = vadd.f32 %v509, %v519
        %v521 = vadd.f32 %v510, %v519
        %v522 = vadd.f32 %v511, %v519
        %v523 = vadd.f32 %v512, %v519
        %v524 = vadd.f32 %v513, %v519
        %v525 = vadd.f32 %v514, %v519
        %v526 = vadd.f32 %v515, %v519
        %v527 = vadd.f32 %v516, %v519
        %v528 = vadd.f32 %v517, %v519
        %v529 = vmax.f32 %v520, 0.0
        %v530 = vmax.f32 %v521, 0.0
        %v531 = vmax.f32 %v522, 0.0
        %v532 = vmax.f32 %v523, 0.0
        %v533 = vmax.f32 %v524, 0.0
        %v534 = vmax.f32 %v525, 0.0
        %v535 = vmax.f32 %v526, 0.0
        %v536 = vmax.f32 %v527, 0.0
        %v537 = vmax.f32 %v528, 0.0
        %539 = vset.pattern.permute.xlu0 0
        %540 = vperm.xlu0 %539, %v289
        %v541 = vpop.permute.xlu0 %540
        %544 = vset.pattern.permute.xlu0 0
        %545 = vperm.xlu0 %544, %v290
        %v546 = vpop.permute.xlu0 %545
        %549 = vset.pattern.permute.xlu0 0
        %550 = vperm.xlu0 %549, %v291
        %v551 = vpop.permute.xlu0 %550
        %554 = vset.pattern.permute.xlu0 0
        %555 = vperm.xlu0 %554, %v292
        %v556 = vpop.permute.xlu0 %555
        %559 = vset.pattern.permute.xlu0 0
        %560 = vperm.xlu0 %559, %v293
        %v561 = vpop.permute.xlu0 %560
        %564 = vset.pattern.permute.xlu0 0
        %565 = vperm.xlu0 %564, %v294
        %v566 = vpop.permute.xlu0 %565
        %569 = vset.pattern.permute.xlu0 0
        %570 = vperm.xlu0 %569, %v295
        %v571 = vpop.permute.xlu0 %570
        %574 = vset.pattern.permute.xlu0 0
        %575 = vperm.xlu0 %574, %v296
        %v576 = vpop.permute.xlu0 %575
        %579 = vset.pattern.permute.xlu0 0
        %580 = vperm.xlu0 %579, %v297
        %v581 = vpop.permute.xlu0 %580
        %v583 = vmul.f32 %v529, %v541
        %v584 = vmul.f32 %v530, %v546
        %v585 = vmul.f32 %v531, %v551
        %v586 = vmul.f32 %v532, %v556
        %v587 = vmul.f32 %v533, %v561
        %v588 = vmul.f32 %v534, %v566
        %v589 = vmul.f32 %v535, %v571
        %v590 = vmul.f32 %v536, %v576
        %v591 = vmul.f32 %v537, %v581
        %592 = vst [vmem:[#allocation2] sm:$0x1] 0.0
        %593 = vst [vmem:[#allocation2 + $0x47] sm:$0x1] 0.0
        %594 = vst [vmem:[#allocation2 + $0x1] sm:$0xff] %v583
        %595 = vst [vmem:[#allocation2 + $0x9] sm:$0xff] %v584
        %596 = vst [vmem:[#allocation2 + $0x11] sm:$0xff] %v585
        %597 = vst [vmem:[#allocation2 + $0x19] sm:$0xff] %v586
        %598 = vst [vmem:[#allocation2 + $0x21] sm:$0xff] %v587
        %599 = vst [vmem:[#allocation2 + $0x29] sm:$0xff] %v588
        %600 = vst [vmem:[#allocation2 + $0x31] sm:$0xff] %v589
        %601 = vst [vmem:[#allocation2 + $0x39] sm:$0xff] %v590
        %602 = vst [vmem:[#allocation2 + $0x41] sm:$0x3f] %v591
        %v603 = vld [vmem:[#allocation2] sm:$0xff]
        %v604 = vld [vmem:[#allocation2 + $0x8] sm:$0xff]
        %v605 = vld [vmem:[#allocation2 + $0x10] sm:$0xff]
        %v606 = vld [vmem:[#allocation2 + $0x18] sm:$0xff]
        %v607 = vld [vmem:[#allocation2 + $0x20] sm:$0xff]
        %v608 = vld [vmem:[#allocation2 + $0x28] sm:$0xff]
        %v609 = vld [vmem:[#allocation2 + $0x30] sm:$0xff]
        %v610 = vld [vmem:[#allocation2 + $0x38] sm:$0xff]
        %v611 = vld [vmem:[#allocation2 + $0x40] sm:$0x3f]
        %v612 = vld [vmem:[#allocation8] sm:$0xff]
        %v613 = vld [vmem:[#allocation8 + $0x8] sm:$0xff]
        %v614 = vld [vmem:[#allocation8 + $0x10] sm:$0xff]
        %v615 = vld [vmem:[#allocation8 + $0x18] sm:$0xff]
        %v616 = vld [vmem:[#allocation8 + $0x20] sm:$0xff]
        %v617 = vld [vmem:[#allocation8 + $0x28] sm:$0xff]
        %v618 = vld [vmem:[#allocation8 + $0x30] sm:$0xff]
        %v619 = vld [vmem:[#allocation8 + $0x38] sm:$0xff]
        %v620 = vld [vmem:[#allocation8 + $0x40] sm:$0xff]
        %v621 = vld [vmem:[#allocation8 + $0x48] sm:$0xff]
        %v622 = vld [vmem:[#allocation8 + $0x50] sm:$0xff]
        %v623 = vld [vmem:[#allocation8 + $0x58] sm:$0xff]
        %v624 = vld [vmem:[#allocation8 + $0x60] sm:$0xff]
        %v625 = vld [vmem:[#allocation8 + $0x68] sm:$0xff]
        %v626 = vld [vmem:[#allocation8 + $0x70] sm:$0xff]
        %v627 = vld [vmem:[#allocation8 + $0x78] sm:$0xff]
        %v628 = vld [vmem:[#allocation2 + $0x1] sm:$0xff]
        %v629 = vld [vmem:[#allocation2 + $0x9] sm:$0xff]
        %v630 = vld [vmem:[#allocation2 + $0x11] sm:$0xff]
        %v631 = vld [vmem:[#allocation2 + $0x19] sm:$0xff]
        %v632 = vld [vmem:[#allocation2 + $0x21] sm:$0xff]
        %v633 = vld [vmem:[#allocation2 + $0x29] sm:$0xff]
        %v634 = vld [vmem:[#allocation2 + $0x31] sm:$0xff]
        %v635 = vld [vmem:[#allocation2 + $0x39] sm:$0xff]
        %v636 = vld [vmem:[#allocation2 + $0x41] sm:$0x3f]
        %s637 = scalar_lea.vmem [#allocation8], 128
        %v638 = vld [vmem:[%s637] sm:$0xff]
        %v639 = vld [vmem:[%s637 + $0x8] sm:$0xff]
        %v640 = vld [vmem:[%s637 + $0x10] sm:$0xff]
        %v641 = vld [vmem:[%s637 + $0x18] sm:$0xff]
        %v642 = vld [vmem:[%s637 + $0x20] sm:$0xff]
        %v643 = vld [vmem:[%s637 + $0x28] sm:$0xff]
        %v644 = vld [vmem:[%s637 + $0x30] sm:$0xff]
        %v645 = vld [vmem:[%s637 + $0x38] sm:$0xff]
        %v646 = vld [vmem:[%s637 + $0x40] sm:$0xff]
        %v647 = vld [vmem:[%s637 + $0x48] sm:$0xff]
        %v648 = vld [vmem:[%s637 + $0x50] sm:$0xff]
        %v649 = vld [vmem:[%s637 + $0x58] sm:$0xff]
        %v650 = vld [vmem:[%s637 + $0x60] sm:$0xff]
        %v651 = vld [vmem:[%s637 + $0x68] sm:$0xff]
        %v652 = vld [vmem:[%s637 + $0x70] sm:$0xff]
        %v653 = vld [vmem:[%s637 + $0x78] sm:$0xff]
        %654 = vmatpush.msra.mxu0 %v653
        %655 = vmatpush.msra.mxu0 %v652
        %656 = vmatpush.msra.mxu0 %v651
        %657 = vmatpush.msra.mxu0 %v650
        %658 = vmatpush.msra.mxu0 %v649
        %659 = vmatpush.msra.mxu0 %v648
        %660 = vmatpush.msra.mxu0 %v647
        %661 = vmatpush.msra.mxu0 %v646
        %662 = vmatpush.msra.mxu0 %v645
        %663 = vmatpush.msra.mxu0 %v644
        %664 = vmatpush.msra.mxu0 %v643
        %665 = vmatpush.msra.mxu0 %v642
        %666 = vmatpush.msra.mxu0 %v641
        %667 = vmatpush.msra.mxu0 %v640
        %668 = vmatpush.msra.mxu0 %v639
        %669 = vmatpush.msra.mxu0 %v638
        %670 = vmatmul.f32.gmra.mxu0 %v628
        %v671 = vpop.f32.mrf.mxu0
        %v672 = vadd.f32 0.0, %v671
        %673 = vmatmul.f32.gmra.mxu0 %v629
        %v674 = vpop.f32.mrf.mxu0
        %v675 = vadd.f32 0.0, %v674
        %676 = vmatmul.f32.gmra.mxu0 %v630
        %v677 = vpop.f32.mrf.mxu0
        %v678 = vadd.f32 0.0, %v677
        %679 = vmatmul.f32.gmra.mxu0 %v631
        %v680 = vpop.f32.mrf.mxu0
        %v681 = vadd.f32 0.0, %v680
        %682 = vmatmul.f32.gmra.mxu0 %v632
        %v683 = vpop.f32.mrf.mxu0
        %v684 = vadd.f32 0.0, %v683
        %685 = vmatmul.f32.gmra.mxu0 %v633
        %v686 = vpop.f32.mrf.mxu0
        %v687 = vadd.f32 0.0, %v686
        %688 = vmatmul.f32.gmra.mxu0 %v634
        %v689 = vpop.f32.mrf.mxu0
        %v690 = vadd.f32 0.0, %v689
        %691 = vmatmul.f32.gmra.mxu0 %v635
        %v692 = vpop.f32.mrf.mxu0
        %v693 = vadd.f32 0.0, %v692
        %694 = vmatmul.f32.gmra.mxu0 %v636
        %v695 = vpop.f32.mrf.mxu0
        %v696 = vadd.f32 0.0, %v695
        %697 = vdwg.mxu0
        %698 = vmatpush.msra.mxu0 %v627
        %699 = vmatpush.msra.mxu0 %v626
        %700 = vmatpush.msra.mxu0 %v625
        %701 = vmatpush.msra.mxu0 %v624
        %702 = vmatpush.msra.mxu0 %v623
        %703 = vmatpush.msra.mxu0 %v622
        %704 = vmatpush.msra.mxu0 %v621
        %705 = vmatpush.msra.mxu0 %v620
        %706 = vmatpush.msra.mxu0 %v619
        %707 = vmatpush.msra.mxu0 %v618
        %708 = vmatpush.msra.mxu0 %v617
        %709 = vmatpush.msra.mxu0 %v616
        %710 = vmatpush.msra.mxu0 %v615
        %711 = vmatpush.msra.mxu0 %v614
        %712 = vmatpush.msra.mxu0 %v613
        %713 = vmatpush.msra.mxu0 %v612
        %714 = vmatmul.f32.gmra.mxu0 %v603
        %v715 = vpop.f32.mrf.mxu0
        %v716 = vadd.f32 %v672, %v715
        %717 = vmatmul.f32.gmra.mxu0 %v604
        %v718 = vpop.f32.mrf.mxu0
        %v719 = vadd.f32 %v675, %v718
        %720 = vmatmul.f32.gmra.mxu0 %v605
        %v721 = vpop.f32.mrf.mxu0
        %v722 = vadd.f32 %v678, %v721
        %723 = vmatmul.f32.gmra.mxu0 %v606
        %v724 = vpop.f32.mrf.mxu0
        %v725 = vadd.f32 %v681, %v724
        %726 = vmatmul.f32.gmra.mxu0 %v607
        %v727 = vpop.f32.mrf.mxu0
        %v728 = vadd.f32 %v684, %v727
        %729 = vmatmul.f32.gmra.mxu0 %v608
        %v730 = vpop.f32.mrf.mxu0
        %v731 = vadd.f32 %v687, %v730
        %732 = vmatmul.f32.gmra.mxu0 %v609
        %v733 = vpop.f32.mrf.mxu0
        %v734 = vadd.f32 %v690, %v733
        %735 = vmatmul.f32.gmra.mxu0 %v610
        %v736 = vpop.f32.mrf.mxu0
        %v737 = vadd.f32 %v693, %v736
        %738 = vmatmul.f32.gmra.mxu0 %v611
        %v739 = vpop.f32.mrf.mxu0
        %v740 = vadd.f32 %v696, %v739
        %741 = vdwg.mxu0
        %v742 = vld [vmem:[#allocation2 + $0x2] sm:$0xff]
        %v743 = vld [vmem:[#allocation2 + $0xa] sm:$0xff]
        %v744 = vld [vmem:[#allocation2 + $0x12] sm:$0xff]
        %v745 = vld [vmem:[#allocation2 + $0x1a] sm:$0xff]
        %v746 = vld [vmem:[#allocation2 + $0x22] sm:$0xff]
        %v747 = vld [vmem:[#allocation2 + $0x2a] sm:$0xff]
        %v748 = vld [vmem:[#allocation2 + $0x32] sm:$0xff]
        %v749 = vld [vmem:[#allocation2 + $0x3a] sm:$0xff]
        %v750 = vld [vmem:[#allocation2 + $0x42] sm:$0x3f]
        %s751 = scalar_lea.vmem [#allocation8], 256
        %v752 = vld [vmem:[%s751] sm:$0xff]
        %v753 = vld [vmem:[%s751 + $0x8] sm:$0xff]
        %v754 = vld [vmem:[%s751 + $0x10] sm:$0xff]
        %v755 = vld [vmem:[%s751 + $0x18] sm:$0xff]
        %v756 = vld [vmem:[%s751 + $0x20] sm:$0xff]
        %v757 = vld [vmem:[%s751 + $0x28] sm:$0xff]
        %v758 = vld [vmem:[%s751 + $0x30] sm:$0xff]
        %v759 = vld [vmem:[%s751 + $0x38] sm:$0xff]
        %v760 = vld [vmem:[%s751 + $0x40] sm:$0xff]
        %v761 = vld [vmem:[%s751 + $0x48] sm:$0xff]
        %v762 = vld [vmem:[%s751 + $0x50] sm:$0xff]
        %v763 = vld [vmem:[%s751 + $0x58] sm:$0xff]
        %v764 = vld [vmem:[%s751 + $0x60] sm:$0xff]
        %v765 = vld [vmem:[%s751 + $0x68] sm:$0xff]
        %v766 = vld [vmem:[%s751 + $0x70] sm:$0xff]
        %v767 = vld [vmem:[%s751 + $0x78] sm:$0xff]
        %768 = vmatpush.msra.mxu0 %v767
        %769 = vmatpush.msra.mxu0 %v766
        %770 = vmatpush.msra.mxu0 %v765
        %771 = vmatpush.msra.mxu0 %v764
        %772 = vmatpush.msra.mxu0 %v763
        %773 = vmatpush.msra.mxu0 %v762
        %774 = vmatpush.msra.mxu0 %v761
        %775 = vmatpush.msra.mxu0 %v760
        %776 = vmatpush.msra.mxu0 %v759
        %777 = vmatpush.msra.mxu0 %v758
        %778 = vmatpush.msra.mxu0 %v757
        %779 = vmatpush.msra.mxu0 %v756
        %780 = vmatpush.msra.mxu0 %v755
        %781 = vmatpush.msra.mxu0 %v754
        %782 = vmatpush.msra.mxu0 %v753
        %783 = vmatpush.msra.mxu0 %v752
        %784 = vmatmul.f32.gmra.mxu0 %v742
        %v785 = vpop.f32.mrf.mxu0
        %v786 = vadd.f32 0.0, %v785
        %787 = vmatmul.f32.gmra.mxu0 %v743
        %v788 = vpop.f32.mrf.mxu0
        %v789 = vadd.f32 0.0, %v788
        %790 = vmatmul.f32.gmra.mxu0 %v744
        %v791 = vpop.f32.mrf.mxu0
        %v792 = vadd.f32 0.0, %v791
        %793 = vmatmul.f32.gmra.mxu0 %v745
        %v794 = vpop.f32.mrf.mxu0
        %v795 = vadd.f32 0.0, %v794
        %796 = vmatmul.f32.gmra.mxu0 %v746
        %v797 = vpop.f32.mrf.mxu0
        %v798 = vadd.f32 0.0, %v797
        %799 = vmatmul.f32.gmra.mxu0 %v747
        %v800 = vpop.f32.mrf.mxu0
        %v801 = vadd.f32 0.0, %v800
        %802 = vmatmul.f32.gmra.mxu0 %v748
        %v803 = vpop.f32.mrf.mxu0
        %v804 = vadd.f32 0.0, %v803
        %805 = vmatmul.f32.gmra.mxu0 %v749
        %v806 = vpop.f32.mrf.mxu0
        %v807 = vadd.f32 0.0, %v806
        %808 = vmatmul.f32.gmra.mxu0 %v750
        %v809 = vpop.f32.mrf.mxu0
        %v810 = vadd.f32 0.0, %v809
        %811 = vdwg.mxu0
        %v812 = vadd.f32 %v716, %v786
        %v813 = vadd.f32 %v719, %v789
        %v814 = vadd.f32 %v722, %v792
        %v815 = vadd.f32 %v725, %v795
        %v816 = vadd.f32 %v728, %v798
        %v817 = vadd.f32 %v731, %v801
        %v818 = vadd.f32 %v734, %v804
        %v819 = vadd.f32 %v737, %v807
        %v820 = vadd.f32 %v740, %v810
        %v821 = vld [vmem:[%s3 + $0x2] sm:$0x1]
        %v822 = vperm.slane %v821, 0
        %v823 = vmul.f32 %v812, %v822
        %v824 = vmul.f32 %v813, %v822
        %v825 = vmul.f32 %v814, %v822
        %v826 = vmul.f32 %v815, %v822
        %v827 = vmul.f32 %v816, %v822
        %v828 = vmul.f32 %v817, %v822
        %v829 = vmul.f32 %v818, %v822
        %v830 = vmul.f32 %v819, %v822
        %v831 = vmul.f32 %v820, %v822
        %v832 = vld [vmem:[%s3 + $0x3] sm:$0x1]
        %v833 = vperm.slane %v832, 0
        %v834 = vadd.f32 %v823, %v833
        %v835 = vadd.f32 %v824, %v833
        %v836 = vadd.f32 %v825, %v833
        %v837 = vadd.f32 %v826, %v833
        %v838 = vadd.f32 %v827, %v833
        %v839 = vadd.f32 %v828, %v833
        %v840 = vadd.f32 %v829, %v833
        %v841 = vadd.f32 %v830, %v833
        %v842 = vadd.f32 %v831, %v833
        %843 = vst [vmem:[%s277] sm:$0x1] 0.0
        %844 = vst [vmem:[%s277 + $0x47] sm:$0x1] 0.0
        %v845 = vadd.f32 %v280, %v834
        %v846 = vadd.f32 %v281, %v835
        %v847 = vadd.f32 %v282, %v836
        %v848 = vadd.f32 %v283, %v837
        %v849 = vadd.f32 %v284, %v838
        %v850 = vadd.f32 %v285, %v839
        %v851 = vadd.f32 %v286, %v840
        %v852 = vadd.f32 %v287, %v841
        %v853 = vadd.f32 %v288, %v842
        %v854 = vmax.f32 %v845, 0.0
        %v855 = vmax.f32 %v846, 0.0
        %v856 = vmax.f32 %v847, 0.0
        %v857 = vmax.f32 %v848, 0.0
        %v858 = vmax.f32 %v849, 0.0
        %v859 = vmax.f32 %v850, 0.0
        %v860 = vmax.f32 %v851, 0.0
        %v861 = vmax.f32 %v852, 0.0
        %v862 = vmax.f32 %v853, 0.0
        %v863 = vmul.f32 %v854, %v541
        %v864 = vmul.f32 %v855, %v546
        %v865 = vmul.f32 %v856, %v551
        %v866 = vmul.f32 %v857, %v556
        %v867 = vmul.f32 %v858, %v561
        %v868 = vmul.f32 %v859, %v566
        %v869 = vmul.f32 %v860, %v571
        %v870 = vmul.f32 %v861, %v576
        %v871 = vmul.f32 %v862, %v581
        %872 = vst [vmem:[%s277 + $0x1] sm:$0xff] %v863
        %873 = vst [vmem:[%s277 + $0x9] sm:$0xff] %v864
        %874 = vst [vmem:[%s277 + $0x11] sm:$0xff] %v865
        %875 = vst [vmem:[%s277 + $0x19] sm:$0xff] %v866
        %876 = vst [vmem:[%s277 + $0x21] sm:$0xff] %v867
        %877 = vst [vmem:[%s277 + $0x29] sm:$0xff] %v868
        %878 = vst [vmem:[%s277 + $0x31] sm:$0xff] %v869
        %879 = vst [vmem:[%s277 + $0x39] sm:$0xff] %v870
        %880 = vst [vmem:[%s277 + $0x41] sm:$0x3f] %v871
        %s881 = sand.u32 %s141, 1
        %s882 = scalar_lea.sflag [#allocation5], %s881
        %s883 = sand.u32 %s141, 1
        %s884 = smul.addr %s883, 72
        %s885 = scalar_lea.vmem [#allocation9], %s884
        // Predicated region
        $region53: #{tpu_custom_call.1} parent=39 // pred_check
          %p886 = pneg %p151
        $region54: #{tpu_custom_call.1} parent=39 // pred_check_branch
          %888 = sbr.rel (%p886) target = $region56
        $region55: #{tpu_custom_call.1} parent=39 // pred_region
          %s889 = smul.u32 9, %s23
          %891 = vsyncadd %s882, 0
          %s892 = smul.addr %s889, 8
          %s893 = scalar_lea.hbm %s5, %s892
          %s894 = sshll.u32 %s885, 4
          %s895 = int_to_ptr.vmem [resolvable:$true] %s894
          %s896 = sshll.u32 %s893, 4
          %s897 = int_to_ptr.hbm [resolvable:$true] %s896
          %902 = dma.vmem_to_hbm [thread:$0]  %s895, 1152, %s897, %s882, 128, 128, 8
        $region56: #{tpu_custom_call.1} parent=39 // pred_fallthru
          _
      $region40: #{tpu_custom_call.1} parent=5 // pred_fallthru
        _
      %p903 = scmp.le.s32.totalorder 2, %s18
      // Predicated region
      $region57: #{tpu_custom_call.1} parent=5 // pred_check
        %p904 = pneg %p903
      $region58: #{tpu_custom_call.1} parent=5 // pred_check_branch
        %906 = sbr.rel (%p904) target = $region60
      $region59: #{tpu_custom_call.1} parent=5 // pred_region
        %s907 = ssub.s32 %s18, 2
        // Predicated region
        $region61: #{tpu_custom_call.1} parent=59 // pred_check
          %p908 = pneg %p157
        $region62: #{tpu_custom_call.1} parent=59 // pred_check_branch
          %910 = sbr.rel (%p908) target = $region64
        $region63: #{tpu_custom_call.1} parent=59 // pred_region
          %s911 = sand.u32 %s142, 1
          %s912 = scalar_lea.sflag [#allocation5], %s911
          %s913 = sand.u32 %s142, 1
          %s914 = smul.addr %s913, 72
          %s915 = scalar_lea.vmem [#allocation9], %s914
          %917 = dma.done %s912, 1152
        $region64: #{tpu_custom_call.1} parent=59 // pred_fallthru
          _
      $region60: #{tpu_custom_call.1} parent=5 // pred_fallthru
        _
    $region6: #{tpu_custom_call.1} parent=1 // loop_footer
      %s22 = sadd.s32 1, %s18
    $region7: #{tpu_custom_call.1} parent=1 // loop_footer_branch
      %17 = sbr.rel target = $region3
    $region8: #{tpu_custom_call.1} parent=1 // loop_exit
      _
    %918 = vsyncpa [#allocation4], 1
    %s919 = scalar_lea.sflag [#allocation4], 1
    %920 = vsyncpa %s919, 1
    %921 = vsyncpa [#allocation7], 1
    %922 = vsyncpa [#allocation5], 1
    %s923 = scalar_lea.sflag [#allocation5], 1
    %924 = vsyncpa %s923, 1

</llo_original>
